<compile_context>
chip_gen: v5e
topology: v5e:2x2
jax: 0.10.0
libtpu: 0.0.40
codegen_flags: <defaults>
</compile_context>

<pallas_src>
import jax
import jax.numpy as jnp
from jax.experimental import pallas as pl
from jax.experimental.pallas import tpu as pltpu

LANE = 128      # vreg lane width
SUBLANE = 8     # f32 sublane count


def _round_up(x, m):
    return ((x + m - 1) // m) * m


def _x_index_map(i):
    return (i, 0)


def _const_index_map(i):
    return (0, 0)


def _make_mlp_kernel(num_layers):
    """Fused MLP kernel: num_layers Linear layers, ReLU on all but the last."""

    def kernel(*refs):
        # refs = (x_ref, w0, b0, w1, b1, ..., w_last, b_last, o_ref)
        x_ref = refs[0]
        o_ref = refs[-1]
        param_refs = refs[1:-1]

        h = x_ref[...]                                  # f32 activations
        for i in range(num_layers):
            w = param_refs[2 * i][...]                  # (K, N) bf16 (or f32)
            b = param_refs[2 * i + 1][...]              # (1, N) f32
            # Feed the MXU its native narrow dtype; accumulate in f32.
            h = jnp.dot(h.astype(w.dtype), w,
                        preferred_element_type=jnp.float32) + b
            if i < num_layers - 1:
                h = jnp.maximum(h, 0.0)                 # ReLU on hidden layers
        o_ref[...] = h.astype(o_ref.dtype)

    return kernel


def mlp_forward(x, params, *, batch_tile=128, param_dtype=jnp.bfloat16):
    """Fused MLP forward.

    x:      (B, D_in) float32
    params: list of (W, b) with W: (D_in_i, D_out_i) f32, b: (1, D_out_i) f32
    """
    assert x.ndim == 2
    batch, d_in = x.shape
    num_layers = len(params)
    out_dim = params[-1][0].shape[1]

    # ---- pad every layer's output width to a lane-dense multiple of 128 ----
    padded_params = []
    prev_out_pad = d_in          # input feature dim stays unpadded (full-dim block)
    for (w, b) in params:
        k, n = w.shape
        n_pad = _round_up(n, LANE)
        k_pad = prev_out_pad
        w_pad = jnp.zeros((k_pad, n_pad), jnp.float32).at[:k, :n].set(w)
        b_pad = jnp.zeros((1, n_pad), jnp.float32).at[:, :n].set(
            jnp.asarray(b).reshape(1, -1))
        padded_params.append((w_pad.astype(param_dtype), b_pad))
        prev_out_pad = n_pad
    out_pad = prev_out_pad

    # ---- tile / pad the batch dimension ----
    tm = min(batch_tile, _round_up(batch, SUBLANE))
    tm = _round_up(tm, SUBLANE)
    b_rows = _round_up(batch, tm)
    if b_rows != batch:
        x = jnp.concatenate(
            [x, jnp.zeros((b_rows - batch, d_in), x.dtype)], axis=0)
    grid = (b_rows // tm,)

    operands = [x]
    in_specs = [pl.BlockSpec((tm, d_in), _x_index_map)]
    for w_p, b_p in padded_params:
        operands += [w_p, b_p]
        in_specs += [pl.BlockSpec(w_p.shape, _const_index_map),   # VMEM-resident
                     pl.BlockSpec(b_p.shape, _const_index_map)]
    out_spec = pl.BlockSpec((tm, out_pad), _x_index_map)

    # ---- cost estimate (lets XLA overlap the custom call with neighbors) ----
    flops = 2 * b_rows * sum(w.shape[0] * w.shape[1] for w, _ in padded_params)
    bytes_accessed = (
        x.size * x.dtype.itemsize
        + sum(w.size * w.dtype.itemsize + b.size * b.dtype.itemsize
              for w, b in padded_params)
        + b_rows * out_pad * 4)
    cost = pl.CostEstimate(flops=flops, transcendentals=0,
                           bytes_accessed=bytes_accessed)

    # ---- explicit VMEM budget: resident params + double-buffered tiles ----
    param_bytes = sum(w.size * w.dtype.itemsize + b.size * b.dtype.itemsize
                      for w, b in padded_params)
    tile_bytes = 2 * (tm * d_in * 4 + tm * out_pad * 4)   # 2x-buffered in/out tiles
    vmem_limit = int(min(max(2 * (param_bytes + tile_bytes) + (8 << 20),
                             32 << 20), 100 << 20))

    kernel = _make_mlp_kernel(num_layers)
    out = pl.pallas_call(
        kernel,
        out_shape=jax.ShapeDtypeStruct((b_rows, out_pad), jnp.float32),
        grid_spec=pltpu.PrefetchScalarGridSpec(
            num_scalar_prefetch=0,
            grid=grid,
            in_specs=in_specs,
            out_specs=out_spec,
        ),
        compiler_params=pltpu.CompilerParams(
            dimension_semantics=("parallel",),
            vmem_limit_bytes=vmem_limit,
        ),
        cost_estimate=cost,
    )(*operands)

    # slice off batch + lane padding
    return out[:batch, :out_dim]


def init_mlp_params(key, input_size, hidden_sizes, output_size):
    """PyTorch-Linear-style init: U(-1/sqrt(fan_in), +1/sqrt(fan_in))."""
    params = []
    in_size = input_size
    sizes = list(hidden_sizes) + [output_size]
    for next_size in sizes:
        key, kw, kb = jax.random.split(key, 3)
        bound = 1.0 / jnp.sqrt(jnp.float32(in_size))
        # stored as (in, out) -- transpose of PyTorch's (out, in)
        w = jax.random.uniform(kw, (in_size, next_size), jnp.float32, -bound, bound)
        b = jax.random.uniform(kb, (1, next_size), jnp.float32, -bound, bound)
        params.append((w, b))
        in_size = next_size
    return params


def mlp_reference(x, params, param_dtype=jnp.bfloat16):
    """Pure-JAX reference mirroring the kernel math (bf16 matmul inputs, f32 acc)."""
    h = x.astype(jnp.float32)
    n = len(params)
    for i, (w, b) in enumerate(params):
        h = jnp.dot(h.astype(param_dtype), w.astype(param_dtype),
                    preferred_element_type=jnp.float32) + b
        if i < n - 1:
            h = jnp.maximum(h, 0.0)
    return h


if __name__ == "__main__":
    key = jax.random.PRNGKey(0)

    batch = 256            # multiple batch tiles -> exercises the pipeline
    input_size = 16
    hidden_sizes = [32, 32]
    output_size = 4

    key, kx = jax.random.split(key)
    x = jax.random.normal(kx, (batch, input_size), jnp.float32)

    params = init_mlp_params(key, input_size, hidden_sizes, output_size)

    out = mlp_forward(x, params, batch_tile=128)
    out = jax.block_until_ready(out)

    ref = mlp_reference(x, params)
    assert out.shape == (batch, output_size), out.shape
    assert jnp.allclose(out, ref, atol=1e-3, rtol=1e-3), float(
        jnp.max(jnp.abs(out - ref)))

    print("KERNEL_OK")
</pallas_src>

<mosaic_0001>
module attributes {stable_mosaic.version = 11 : i64} {
  func.func @kernel(%arg0: i32, %arg1: memref<128x16xf32, #tpu.memory_space<vmem>>, %arg2: memref<16x128xbf16, #tpu.memory_space<vmem>>, %arg3: memref<1x128xf32, #tpu.memory_space<vmem>>, %arg4: memref<128x128xbf16, #tpu.memory_space<vmem>>, %arg5: memref<1x128xf32, #tpu.memory_space<vmem>>, %arg6: memref<128x128xbf16, #tpu.memory_space<vmem>>, %arg7: memref<1x128xf32, #tpu.memory_space<vmem>>, %arg8: memref<128x128xf32, #tpu.memory_space<vmem>>) attributes {dimension_semantics = [#tpu.dimension_semantics<parallel>], iteration_bounds = array<i64: 2>, scalar_prefetch = 0 : i64, scratch_operands = 0 : i64, tpu.core_type = #tpu.core_type<tc>, window_params = [{transform_indices = @transform_0, window_bounds = array<i64: 128, 16>}, {pipeline_mode = #tpu.pipeline_mode<synchronous>, transform_indices = @transform_1, window_bounds = array<i64: 16, 128>}, {pipeline_mode = #tpu.pipeline_mode<synchronous>, transform_indices = @transform_2, window_bounds = array<i64: 1, 128>}, {pipeline_mode = #tpu.pipeline_mode<synchronous>, transform_indices = @transform_3, window_bounds = array<i64: 128, 128>}, {pipeline_mode = #tpu.pipeline_mode<synchronous>, transform_indices = @transform_4, window_bounds = array<i64: 1, 128>}, {pipeline_mode = #tpu.pipeline_mode<synchronous>, transform_indices = @transform_5, window_bounds = array<i64: 128, 128>}, {pipeline_mode = #tpu.pipeline_mode<synchronous>, transform_indices = @transform_6, window_bounds = array<i64: 1, 128>}, {transform_indices = @transform_7, window_bounds = array<i64: 128, 128>}]} {
    %c0 = arith.constant 0 : index
    %c0_0 = arith.constant 0 : index
    %0 = vector.load %arg1[%c0, %c0_0] : memref<128x16xf32, #tpu.memory_space<vmem>>, vector<128x16xf32>
    %c0_1 = arith.constant 0 : index
    %c0_2 = arith.constant 0 : index
    %1 = vector.load %arg2[%c0_1, %c0_2] : memref<16x128xbf16, #tpu.memory_space<vmem>>, vector<16x128xbf16>
    %c0_3 = arith.constant 0 : index
    %c0_4 = arith.constant 0 : index
    %2 = vector.load %arg3[%c0_3, %c0_4] : memref<1x128xf32, #tpu.memory_space<vmem>>, vector<1x128xf32>
    %3 = arith.truncf %0 : vector<128x16xf32> to vector<128x16xbf16>
    %cst = arith.constant dense<0.000000e+00> : vector<128x128xf32>
    %4 = tpu.matmul %3, %1, %cst {dimension_numbers = #tpu.dot_dimension_numbers<[1], [0], [0], [1], [0, 0, 1, 1], [], []>} : vector<128x16xbf16>, vector<16x128xbf16>, vector<128x128xf32> -> vector<128x128xf32>
    %5 = vector.broadcast %2 : vector<1x128xf32> to vector<128x128xf32>
    %6 = arith.addf %4, %5 : vector<128x128xf32>
    %cst_5 = arith.constant 0.000000e+00 : f32
    %7 = vector.broadcast %cst_5 : f32 to vector<128x128xf32>
    %8 = arith.maximumf %6, %7 : vector<128x128xf32>
    %c0_6 = arith.constant 0 : index
    %c0_7 = arith.constant 0 : index
    %9 = vector.load %arg4[%c0_6, %c0_7] : memref<128x128xbf16, #tpu.memory_space<vmem>>, vector<128x128xbf16>
    %c0_8 = arith.constant 0 : index
    %c0_9 = arith.constant 0 : index
    %10 = vector.load %arg5[%c0_8, %c0_9] : memref<1x128xf32, #tpu.memory_space<vmem>>, vector<1x128xf32>
    %11 = arith.truncf %8 : vector<128x128xf32> to vector<128x128xbf16>
    %cst_10 = arith.constant dense<0.000000e+00> : vector<128x128xf32>
    %12 = tpu.matmul %11, %9, %cst_10 {dimension_numbers = #tpu.dot_dimension_numbers<[1], [0], [0], [1], [0, 0, 1, 1], [], []>} : vector<128x128xbf16>, vector<128x128xbf16>, vector<128x128xf32> -> vector<128x128xf32>
    %13 = vector.broadcast %10 : vector<1x128xf32> to vector<128x128xf32>
    %14 = arith.addf %12, %13 : vector<128x128xf32>
    %cst_11 = arith.constant 0.000000e+00 : f32
    %15 = vector.broadcast %cst_11 : f32 to vector<128x128xf32>
    %16 = arith.maximumf %14, %15 : vector<128x128xf32>
    %c0_12 = arith.constant 0 : index
    %c0_13 = arith.constant 0 : index
    %17 = vector.load %arg6[%c0_12, %c0_13] : memref<128x128xbf16, #tpu.memory_space<vmem>>, vector<128x128xbf16>
    %c0_14 = arith.constant 0 : index
    %c0_15 = arith.constant 0 : index
    %18 = vector.load %arg7[%c0_14, %c0_15] : memref<1x128xf32, #tpu.memory_space<vmem>>, vector<1x128xf32>
    %19 = arith.truncf %16 : vector<128x128xf32> to vector<128x128xbf16>
    %cst_16 = arith.constant dense<0.000000e+00> : vector<128x128xf32>
    %20 = tpu.matmul %19, %17, %cst_16 {dimension_numbers = #tpu.dot_dimension_numbers<[1], [0], [0], [1], [0, 0, 1, 1], [], []>} : vector<128x128xbf16>, vector<128x128xbf16>, vector<128x128xf32> -> vector<128x128xf32>
    %21 = vector.broadcast %18 : vector<1x128xf32> to vector<128x128xf32>
    %22 = arith.addf %20, %21 : vector<128x128xf32>
    %c0_17 = arith.constant 0 : index
    %c0_18 = arith.constant 0 : index
    %23 = vector.load %arg8[%c0_17, %c0_18] : memref<128x128xf32, #tpu.memory_space<vmem>>, vector<128x128xf32>
    tpu.vector_store %arg8[%c0_17, %c0_18], %22 {strides = array<i32>} : memref<128x128xf32, #tpu.memory_space<vmem>>, vector<128x128xf32>,
    return
  }
  func.func @transform_0(%arg0: i32) -> (i32, i32) {
    %c0_i32 = arith.constant 0 : i32
    %c0_i32_0 = arith.constant 0 : i32
    return %arg0, %c0_i32 : i32, i32
  }
  func.func @transform_1(%arg0: i32) -> (i32, i32) {
    %c0_i32 = arith.constant 0 : i32
    %c0_i32_0 = arith.constant 0 : i32
    %c0_i32_1 = arith.constant 0 : i32
    return %c0_i32, %c0_i32_0 : i32, i32
  }
  func.func @transform_2(%arg0: i32) -> (i32, i32) {
    %c0_i32 = arith.constant 0 : i32
    %c0_i32_0 = arith.constant 0 : i32
    %c0_i32_1 = arith.constant 0 : i32
    return %c0_i32, %c0_i32_0 : i32, i32
  }
  func.func @transform_3(%arg0: i32) -> (i32, i32) {
    %c0_i32 = arith.constant 0 : i32
    %c0_i32_0 = arith.constant 0 : i32
    %c0_i32_1 = arith.constant 0 : i32
    return %c0_i32, %c0_i32_0 : i32, i32
  }
  func.func @transform_4(%arg0: i32) -> (i32, i32) {
    %c0_i32 = arith.constant 0 : i32
    %c0_i32_0 = arith.constant 0 : i32
    %c0_i32_1 = arith.constant 0 : i32
    return %c0_i32, %c0_i32_0 : i32, i32
  }
  func.func @transform_5(%arg0: i32) -> (i32, i32) {
    %c0_i32 = arith.constant 0 : i32
    %c0_i32_0 = arith.constant 0 : i32
    %c0_i32_1 = arith.constant 0 : i32
    return %c0_i32, %c0_i32_0 : i32, i32
  }
  func.func @transform_6(%arg0: i32) -> (i32, i32) {
    %c0_i32 = arith.constant 0 : i32
    %c0_i32_0 = arith.constant 0 : i32
    %c0_i32_1 = arith.constant 0 : i32
    return %c0_i32, %c0_i32_0 : i32, i32
  }
  func.func @transform_7(%arg0: i32) -> (i32, i32) {
    %c0_i32 = arith.constant 0 : i32
    %c0_i32_0 = arith.constant 0 : i32
    return %arg0, %c0_i32 : i32, i32
  }
}

</mosaic_0001>

<llo_original>
// kernel: tpu_custom_call.1
$region0: #{tpu_custom_call.1}
  #allocation0 [shape = 'u32[]', space=smem, size = 0x4, offset = 0x4, fixed_abs, tag = 'smem constant byte address 0x4 - core index']
  #allocation1 [shape = 'u32[72,128]{1,0:T(1,128)}', space=vmem, size = 0x9000, scoped, tag = 'internal scratch']
  %s0 = inlined_call_operand.vmem [shape: f32[256,16], index: 0, kind: input, shape index: {}]
  %s1 = inlined_call_operand.vmem [shape: bf16[16,128], index: 1, kind: input, shape index: {}]
  %s2 = inlined_call_operand.vmem [shape: f32[1,128], index: 2, kind: input, shape index: {}]
  %s3 = inlined_call_operand.vmem [shape: bf16[128,128], index: 3, kind: input, shape index: {}]
  %s4 = inlined_call_operand.vmem [shape: f32[1,128], index: 4, kind: input, shape index: {}]
  %s5 = inlined_call_operand.vmem [shape: bf16[128,128], index: 5, kind: input, shape index: {}]
  %s6 = inlined_call_operand.vmem [shape: f32[1,128], index: 6, kind: input, shape index: {}]
  %s7 = inlined_call_operand.hbm [shape: f32[256,128], index: 7, kind: output, shape index: {}]
  %s8 = sld [smem:[#allocation0]]
  $region61: #{tpu_custom_call.1} parent=0
    _
  %s10 = ssub.s32 1, %s8
  %s11 = scalar_select 0, %s10, %s8
  $region1: #{tpu_custom_call.1} parent=0
    #allocation2 [shape = 'u8[131072]{0}', space=vmem, size = 0x20000, scoped, tag = 'output window, operand 0']
    #allocation3 [shape = 's32[2]{0}', space=sflag, size = 0x8, scoped, tag = 'scoped memory for tpu_custom_call.1']
    %12 = vsyncpa [#allocation3], 0
    %s13 = scalar_lea.sflag [#allocation3], 1
    %14 = vsyncpa %s13, 0
    loop: start=0, step=1, limit=4
    $region2: #{tpu_custom_call.1} parent=1 // loop_pre_header
      _
    $region3: #{tpu_custom_call.1} parent=1 // loop_header
      %s16 = sphi 0, %s20
      %p17 = scmp.ge.s32.totalorder %s16, 4
      %s26 = sphi 0, %s28
      %s29 = sphi 0, %s26
      %s30 = sphi 0, %s29
      %s46 = sphi 0, %s30
      %s50 = sphi 0, %s50
      %s52 = sphi 0, %s50
      %s53 = sphi 0, %s52
      %s67 = sphi 0, %s53
      %s71 = sphi 0, %s71
      %s73 = sphi 0, %s71
      %s74 = sphi 0, %s73
      %s88 = sphi 0, %s74
      %s92 = sphi 0, %s92
      %s94 = sphi 0, %s92
      %s95 = sphi 0, %s94
      %s109 = sphi 0, %s95
      %s113 = sphi 0, %s113
      %s115 = sphi 0, %s113
      %s116 = sphi 0, %s115
      %s130 = sphi 0, %s116
      %s134 = sphi 0, %s134
      %s136 = sphi 0, %s134
      %s137 = sphi 0, %s136
      %s151 = sphi 0, %s137
      %s155 = sphi 0, %s155
      %s157 = sphi 0, %s155
      %s158 = sphi 0, %s157
      %s172 = sphi 0, %s158
      %s178 = sphi 0, %s180
      %s181 = sphi 0, %s178
      %s182 = sphi 0, %s181
      %s198 = sphi 0, %s182
    $region4: #{tpu_custom_call.1} parent=1 // loop_header_branch
      %19 = sbr.rel (%p17) target = $region8
    $region5: #{tpu_custom_call.1} parent=1 // loop_body
      %s21 = ssub.s32 %s16, 1
      %s22 = ssub.s32 %s16, 2
      %s23 = sadd.s32 %s16, 1
      %s24 = ssub.s32 %s16, %s23
      %p25 = scmp.eq.s32.totalorder %s24, 0
      %s27 = sadd.s32 %s26, 1
      %s28 = scalar_select %p25, %s26, %s27
      %p31 = pneg %p25
      %p32 = scmp.eq.s32.totalorder %s16, 1
      %p33 = por %p31, %p32
      %p34 = scmp.ne.s32.totalorder %s26, %s29
      %p35 = scmp.eq.s32.totalorder %s16, 0
      %p36 = por %p34, %p35
      %p37 = scmp.ne.s32.totalorder %s26, %s29
      %p38 = scmp.eq.s32.totalorder %s21, 1
      %p39 = por %p37, %p38
      %p40 = scmp.ne.s32.totalorder %s29, %s30
      %p41 = scmp.eq.s32.totalorder %s21, 0
      %p42 = por %p40, %p41
      %p43 = scmp.ne.s32.totalorder %s29, %s30
      %p44 = scmp.eq.s32.totalorder %s22, 1
      %p45 = por %p43, %p44
      %p47 = scmp.ne.s32.totalorder %s30, %s46
      %p48 = scmp.eq.s32.totalorder %s22, 0
      %p49 = por %p47, %p48
      %s51 = sadd.s32 %s50, 1
      %p54 = scmp.eq.s32.totalorder %s16, 1
      %p55 = scmp.ne.s32.totalorder %s50, %s52
      %p56 = scmp.eq.s32.totalorder %s16, 0
      %p57 = por %p55, %p56
      %p58 = scmp.ne.s32.totalorder %s50, %s52
      %p59 = scmp.eq.s32.totalorder %s21, 1
      %p60 = por %p58, %p59
      %p61 = scmp.ne.s32.totalorder %s52, %s53
      %p62 = scmp.eq.s32.totalorder %s21, 0
      %p63 = por %p61, %p62
      %p64 = scmp.ne.s32.totalorder %s52, %s53
      %p65 = scmp.eq.s32.totalorder %s22, 1
      %p66 = por %p64, %p65
      %p68 = scmp.ne.s32.totalorder %s53, %s67
      %p69 = scmp.eq.s32.totalorder %s22, 0
      %p70 = por %p68, %p69
      %s72 = sadd.s32 %s71, 1
      %p75 = scmp.eq.s32.totalorder %s16, 1
      %p76 = scmp.ne.s32.totalorder %s71, %s73
      %p77 = scmp.eq.s32.totalorder %s16, 0
      %p78 = por %p76, %p77
      %p79 = scmp.ne.s32.totalorder %s71, %s73
      %p80 = scmp.eq.s32.totalorder %s21, 1
      %p81 = por %p79, %p80
      %p82 = scmp.ne.s32.totalorder %s73, %s74
      %p83 = scmp.eq.s32.totalorder %s21, 0
      %p84 = por %p82, %p83
      %p85 = scmp.ne.s32.totalorder %s73, %s74
      %p86 = scmp.eq.s32.totalorder %s22, 1
      %p87 = por %p85, %p86
      %p89 = scmp.ne.s32.totalorder %s74, %s88
      %p90 = scmp.eq.s32.totalorder %s22, 0
      %p91 = por %p89, %p90
      %s93 = sadd.s32 %s92, 1
      %p96 = scmp.eq.s32.totalorder %s16, 1
      %p97 = scmp.ne.s32.totalorder %s92, %s94
      %p98 = scmp.eq.s32.totalorder %s16, 0
      %p99 = por %p97, %p98
      %p100 = scmp.ne.s32.totalorder %s92, %s94
      %p101 = scmp.eq.s32.totalorder %s21, 1
      %p102 = por %p100, %p101
      %p103 = scmp.ne.s32.totalorder %s94, %s95
      %p104 = scmp.eq.s32.totalorder %s21, 0
      %p105 = por %p103, %p104
      %p106 = scmp.ne.s32.totalorder %s94, %s95
      %p107 = scmp.eq.s32.totalorder %s22, 1
      %p108 = por %p106, %p107
      %p110 = scmp.ne.s32.totalorder %s95, %s109
      %p111 = scmp.eq.s32.totalorder %s22, 0
      %p112 = por %p110, %p111
      %s114 = sadd.s32 %s113, 1
      %p117 = scmp.eq.s32.totalorder %s16, 1
      %p118 = scmp.ne.s32.totalorder %s113, %s115
      %p119 = scmp.eq.s32.totalorder %s16, 0
      %p120 = por %p118, %p119
      %p121 = scmp.ne.s32.totalorder %s113, %s115
      %p122 = scmp.eq.s32.totalorder %s21, 1
      %p123 = por %p121, %p122
      %p124 = scmp.ne.s32.totalorder %s115, %s116
      %p125 = scmp.eq.s32.totalorder %s21, 0
      %p126 = por %p124, %p125
      %p127 = scmp.ne.s32.totalorder %s115, %s116
      %p128 = scmp.eq.s32.totalorder %s22, 1
      %p129 = por %p127, %p128
      %p131 = scmp.ne.s32.totalorder %s116, %s130
      %p132 = scmp.eq.s32.totalorder %s22, 0
      %p133 = por %p131, %p132
      %s135 = sadd.s32 %s134, 1
      %p138 = scmp.eq.s32.totalorder %s16, 1
      %p139 = scmp.ne.s32.totalorder %s134, %s136
      %p140 = scmp.eq.s32.totalorder %s16, 0
      %p141 = por %p139, %p140
      %p142 = scmp.ne.s32.totalorder %s134, %s136
      %p143 = scmp.eq.s32.totalorder %s21, 1
      %p144 = por %p142, %p143
      %p145 = scmp.ne.s32.totalorder %s136, %s137
      %p146 = scmp.eq.s32.totalorder %s21, 0
      %p147 = por %p145, %p146
      %p148 = scmp.ne.s32.totalorder %s136, %s137
      %p149 = scmp.eq.s32.totalorder %s22, 1
      %p150 = por %p148, %p149
      %p152 = scmp.ne.s32.totalorder %s137, %s151
      %p153 = scmp.eq.s32.totalorder %s22, 0
      %p154 = por %p152, %p153
      %s156 = sadd.s32 %s155, 1
      %p159 = scmp.eq.s32.totalorder %s16, 1
      %p160 = scmp.ne.s32.totalorder %s155, %s157
      %p161 = scmp.eq.s32.totalorder %s16, 0
      %p162 = por %p160, %p161
      %p163 = scmp.ne.s32.totalorder %s155, %s157
      %p164 = scmp.eq.s32.totalorder %s21, 1
      %p165 = por %p163, %p164
      %p166 = scmp.ne.s32.totalorder %s157, %s158
      %p167 = scmp.eq.s32.totalorder %s21, 0
      %p168 = por %p166, %p167
      %p169 = scmp.ne.s32.totalorder %s157, %s158
      %p170 = scmp.eq.s32.totalorder %s22, 1
      %p171 = por %p169, %p170
      %p173 = scmp.ne.s32.totalorder %s158, %s172
      %p174 = scmp.eq.s32.totalorder %s22, 0
      %p175 = por %p173, %p174
      %s176 = ssub.s32 %s16, %s23
      %p177 = scmp.eq.s32.totalorder %s176, 0
      %s179 = sadd.s32 %s178, 1
      %s180 = scalar_select %p177, %s178, %s179
      %p183 = pneg %p177
      %p184 = scmp.eq.s32.totalorder %s16, 1
      %p185 = por %p183, %p184
      %p186 = scmp.ne.s32.totalorder %s178, %s181
      %p187 = scmp.eq.s32.totalorder %s16, 0
      %p188 = por %p186, %p187
      %p189 = scmp.ne.s32.totalorder %s178, %s181
      %p190 = scmp.eq.s32.totalorder %s21, 1
      %p191 = por %p189, %p190
      %p192 = scmp.ne.s32.totalorder %s181, %s182
      %p193 = scmp.eq.s32.totalorder %s21, 0
      %p194 = por %p192, %p193
      %p195 = scmp.ne.s32.totalorder %s181, %s182
      %p196 = scmp.eq.s32.totalorder %s22, 1
      %p197 = por %p195, %p196
      %p199 = scmp.ne.s32.totalorder %s182, %s198
      %p200 = scmp.eq.s32.totalorder %s22, 0
      %p201 = por %p199, %p200
      %p202 = scmp.le.s32.totalorder 1, %s16
      %p203 = scmp.lt.s32.totalorder %s16, 3
      %p204 = pnand %p202, %p203
      %p205 = pneg %p204
      // Predicated region
      $region9: #{tpu_custom_call.1} parent=5 // pred_check
        _
      $region10: #{tpu_custom_call.1} parent=5 // pred_check_branch
        %207 = sbr.rel (%p204) target = $region12
      $region11: #{tpu_custom_call.1} parent=5 // pred_region
        %s208 = ssub.s32 %s16, 1
        // Predicated region
        $region13: #{tpu_custom_call.1} parent=11 // pred_check
          %p209 = pneg %p63
        $region14: #{tpu_custom_call.1} parent=11 // pred_check_branch
          %211 = sbr.rel (%p209) target = $region16
        $region15: #{tpu_custom_call.1} parent=11 // pred_region
          _
        $region16: #{tpu_custom_call.1} parent=11 // pred_fallthru
          _
        // Predicated region
        $region17: #{tpu_custom_call.1} parent=11 // pred_check
          %p212 = pneg %p84
        $region18: #{tpu_custom_call.1} parent=11 // pred_check_branch
          %214 = sbr.rel (%p212) target = $region20
        $region19: #{tpu_custom_call.1} parent=11 // pred_region
          _
        $region20: #{tpu_custom_call.1} parent=11 // pred_fallthru
          _
        // Predicated region
        $region21: #{tpu_custom_call.1} parent=11 // pred_check
          %p215 = pneg %p105
        $region22: #{tpu_custom_call.1} parent=11 // pred_check_branch
          %217 = sbr.rel (%p215) target = $region24
        $region23: #{tpu_custom_call.1} parent=11 // pred_region
          _
        $region24: #{tpu_custom_call.1} parent=11 // pred_fallthru
          _
        // Predicated region
        $region25: #{tpu_custom_call.1} parent=11 // pred_check
          %p218 = pneg %p126
        $region26: #{tpu_custom_call.1} parent=11 // pred_check_branch
          %220 = sbr.rel (%p218) target = $region28
        $region27: #{tpu_custom_call.1} parent=11 // pred_region
          _
        $region28: #{tpu_custom_call.1} parent=11 // pred_fallthru
          _
        // Predicated region
        $region29: #{tpu_custom_call.1} parent=11 // pred_check
          %p221 = pneg %p147
        $region30: #{tpu_custom_call.1} parent=11 // pred_check_branch
          %223 = sbr.rel (%p221) target = $region32
        $region31: #{tpu_custom_call.1} parent=11 // pred_region
          _
        $region32: #{tpu_custom_call.1} parent=11 // pred_fallthru
          _
        // Predicated region
        $region33: #{tpu_custom_call.1} parent=11 // pred_check
          %p224 = pneg %p168
        $region34: #{tpu_custom_call.1} parent=11 // pred_check_branch
          %226 = sbr.rel (%p224) target = $region36
        $region35: #{tpu_custom_call.1} parent=11 // pred_region
          _
        $region36: #{tpu_custom_call.1} parent=11 // pred_fallthru
          _
      $region12: #{tpu_custom_call.1} parent=5 // pred_fallthru
        _
      %p227 = scmp.lt.s32.totalorder %s16, 2
      // Predicated region
      $region37: #{tpu_custom_call.1} parent=5 // pred_check
        %p228 = pneg %p227
      $region38: #{tpu_custom_call.1} parent=5 // pred_check_branch
        %230 = sbr.rel (%p228) target = $region40
      $region39: #{tpu_custom_call.1} parent=5 // pred_region
        // Predicated region
        $region41: #{tpu_custom_call.1} parent=39 // pred_check
          %p231 = pneg %p36
        $region42: #{tpu_custom_call.1} parent=39 // pred_check_branch
          %233 = sbr.rel (%p231) target = $region44
        $region43: #{tpu_custom_call.1} parent=39 // pred_region
          %s234 = smul.u32 16, %s16
          %p235 = scmp.lt.s32.totalorder %s234, 31
          %s236 = scalar_select %p235, %s234, 31
          %s237 = smul.addr %s236, 8
          %s238 = scalar_lea.vmem %s0, %s237
          %s239 = smul.u32 16, %s16
        $region44: #{tpu_custom_call.1} parent=39 // pred_fallthru
          _
      $region40: #{tpu_custom_call.1} parent=5 // pred_fallthru
        _
      %p240 = scmp.le.s32.totalorder 1, %s16
      %p241 = scmp.lt.s32.totalorder %s16, 3
      %p242 = pnand %p240, %p241
      %p243 = pneg %p242
      // Predicated region
      $region45: #{tpu_custom_call.1} parent=5 // pred_check
        _
      $region46: #{tpu_custom_call.1} parent=5 // pred_check_branch
        %245 = sbr.rel (%p242) target = $region48
      $region47: #{tpu_custom_call.1} parent=5 // pred_region
        %s246 = ssub.s32 %s16, 1
        %s247 = smul.u32 16, %s21
        %p248 = scmp.lt.s32.totalorder %s247, 31
        %s249 = scalar_select %p248, %s247, 31
        %s250 = smul.addr %s249, 8
        %s251 = scalar_lea.vmem %s0, %s250
        %p252 = pneg %p42
        %p253 = pneg %p39
        %p254 = pneg %p63
        %p255 = pneg %p60
        %p256 = pneg %p84
        %p257 = pneg %p81
        %p258 = pneg %p105
        %p259 = pneg %p102
        %p260 = pneg %p126
        %p261 = pneg %p123
        %p262 = pneg %p147
        %p263 = pneg %p144
        %p264 = pneg %p168
        %p265 = pneg %p165
        %p266 = pneg %p194
        %p267 = pneg %p191
        %s268 = sand.u32 %s181, 1
        %s269 = scalar_lea.sflag [#allocation3], %s268
        %s270 = sand.u32 %s181, 1
        %s271 = smul.addr %s270, 128
        %s272 = scalar_lea.vmem [#allocation2], %s271
        %s273 = smul.u32 16, %s21
        %p274 = scmp.lt.s32.totalorder %s273, 31
        %s275 = scalar_select %p274, %s273, 31
        %s276 = smul.addr %s275, 8
        %s277 = scalar_lea.vmem %s0, %s276
        %s278 = smul.u32 16, %s21
        %s279 = smul.u32 16, %s21
        %v281 = vld [vmem:[%s277] sm:$0xff]
        %v282 = vld [vmem:[%s277 + $0x8] sm:$0xff]
        %v283 = vld [vmem:[%s277 + $0x10] sm:$0xff]
        %v284 = vld [vmem:[%s277 + $0x18] sm:$0xff]
        %v285 = vld [vmem:[%s277 + $0x20] sm:$0xff]
        %v286 = vld [vmem:[%s277 + $0x28] sm:$0xff]
        %v287 = vld [vmem:[%s277 + $0x30] sm:$0xff]
        %v288 = vld [vmem:[%s277 + $0x38] sm:$0xff]
        %v289 = vld [vmem:[%s277 + $0x40] sm:$0xff]
        %v290 = vld [vmem:[%s277 + $0x48] sm:$0xff]
        %v291 = vld [vmem:[%s277 + $0x50] sm:$0xff]
        %v292 = vld [vmem:[%s277 + $0x58] sm:$0xff]
        %v293 = vld [vmem:[%s277 + $0x60] sm:$0xff]
        %v294 = vld [vmem:[%s277 + $0x68] sm:$0xff]
        %v295 = vld [vmem:[%s277 + $0x70] sm:$0xff]
        %v296 = vld [vmem:[%s277 + $0x78] sm:$0xff]
        %v297 = vld [vmem:[%s1] sm:$0xf]
        %v298 = vld [vmem:[%s1 + $0x4] sm:$0xf]
        %v299 = vld [vmem:[%s2] sm:$0x1]
        %v300 = vpack.c.bf16 %v282, %v281
        %v301 = vpack.c.bf16 %v284, %v283
        %v302 = vpack.c.bf16 %v286, %v285
        %v303 = vpack.c.bf16 %v288, %v287
        %v304 = vpack.c.bf16 %v290, %v289
        %v305 = vpack.c.bf16 %v292, %v291
        %v306 = vpack.c.bf16 %v294, %v293
        %v307 = vpack.c.bf16 %v296, %v295
        %v309 = vperm.slane %v299, 0
        %v313 = vunpack.c.l.b16 %v297
        %v314 = vunpack.c.l.b16 %v298
        %v315 = vpack.c.b16 %v314, %v313
        %vm317 = vcmask 130048
        %v319 = vsel %vm317, %v300, 0
        %v322 = vsel %vm317, %v301, 0
        %v325 = vsel %vm317, %v302, 0
        %v328 = vsel %vm317, %v303, 0
        %v331 = vsel %vm317, %v304, 0
        %v334 = vsel %vm317, %v305, 0
        %v337 = vsel %vm317, %v306, 0
        %v340 = vsel %vm317, %v307, 0
        %342 = vmatpush.bf16.msra.mxu0 0
        %343 = vmatpush.bf16.msra.mxu0 0
        %344 = vmatpush.bf16.msra.mxu0 0
        %345 = vmatpush.bf16.msra.mxu0 0
        %346 = vmatpush.bf16.msra.mxu0 0
        %347 = vmatpush.bf16.msra.mxu0 0
        %348 = vmatpush.bf16.msra.mxu0 0
        %349 = vmatpush.bf16.msra.mxu0 %v315
        %350 = vmatmul.bf16.gmra.mxu0 %v319
        %v351 = vpop.f32.mrf.mxu0
        %v352 = vadd.f32 %v309, %v351
        %v353 = vpop.f32.mrf.mxu0
        %v354 = vadd.f32 %v309, %v353
        %355 = vmatmul.bf16.gmra.mxu0 %v322
        %v356 = vpop.f32.mrf.mxu0
        %v357 = vadd.f32 %v309, %v356
        %v358 = vpop.f32.mrf.mxu0
        %v359 = vadd.f32 %v309, %v358
        %360 = vmatmul.bf16.gmra.mxu0 %v325
        %v361 = vpop.f32.mrf.mxu0
        %v362 = vadd.f32 %v309, %v361
        %v363 = vpop.f32.mrf.mxu0
        %v364 = vadd.f32 %v309, %v363
        %365 = vmatmul.bf16.gmra.mxu0 %v328
        %v366 = vpop.f32.mrf.mxu0
        %v367 = vadd.f32 %v309, %v366
        %v368 = vpop.f32.mrf.mxu0
        %v369 = vadd.f32 %v309, %v368
        %370 = vmatmul.bf16.gmra.mxu0 %v331
        %v371 = vpop.f32.mrf.mxu0
        %v372 = vadd.f32 %v309, %v371
        %v373 = vpop.f32.mrf.mxu0
        %v374 = vadd.f32 %v309, %v373
        %375 = vmatmul.bf16.gmra.mxu0 %v334
        %v376 = vpop.f32.mrf.mxu0
        %v377 = vadd.f32 %v309, %v376
        %v378 = vpop.f32.mrf.mxu0
        %v379 = vadd.f32 %v309, %v378
        %380 = vmatmul.bf16.gmra.mxu0 %v337
        %v381 = vpop.f32.mrf.mxu0
        %v382 = vadd.f32 %v309, %v381
        %v383 = vpop.f32.mrf.mxu0
        %v384 = vadd.f32 %v309, %v383
        %385 = vmatmul.bf16.gmra.mxu0 %v340
        %v386 = vpop.f32.mrf.mxu0
        %v387 = vadd.f32 %v309, %v386
        %v388 = vpop.f32.mrf.mxu0
        %v389 = vadd.f32 %v309, %v388
        %390 = vdwg.mxu0
        %v391 = vmax.f32 %v352, 0.0
        %v392 = vmax.f32 %v354, 0.0
        %v393 = vmax.f32 %v357, 0.0
        %v394 = vmax.f32 %v359, 0.0
        %v395 = vmax.f32 %v362, 0.0
        %v396 = vmax.f32 %v364, 0.0
        %v397 = vmax.f32 %v367, 0.0
        %v398 = vmax.f32 %v369, 0.0
        %v399 = vmax.f32 %v372, 0.0
        %v400 = vmax.f32 %v374, 0.0
        %v401 = vmax.f32 %v377, 0.0
        %v402 = vmax.f32 %v379, 0.0
        %v403 = vmax.f32 %v382, 0.0
        %v404 = vmax.f32 %v384, 0.0
        %v405 = vmax.f32 %v387, 0.0
        %v406 = vmax.f32 %v389, 0.0
        %v407 = vld [vmem:[%s3] sm:$0xf]
        %v408 = vld [vmem:[%s3 + $0x4] sm:$0xf]
        %v409 = vld [vmem:[%s3 + $0x8] sm:$0xf]
        %v410 = vld [vmem:[%s3 + $0xc] sm:$0xf]
        %v411 = vld [vmem:[%s3 + $0x10] sm:$0xf]
        %v412 = vld [vmem:[%s3 + $0x14] sm:$0xf]
        %v413 = vld [vmem:[%s3 + $0x18] sm:$0xf]
        %v414 = vld [vmem:[%s3 + $0x1c] sm:$0xf]
        %v415 = vld [vmem:[%s3 + $0x20] sm:$0xf]
        %v416 = vld [vmem:[%s3 + $0x24] sm:$0xf]
        %v417 = vld [vmem:[%s3 + $0x28] sm:$0xf]
        %v418 = vld [vmem:[%s3 + $0x2c] sm:$0xf]
        %v419 = vld [vmem:[%s3 + $0x30] sm:$0xf]
        %v420 = vld [vmem:[%s3 + $0x34] sm:$0xf]
        %v421 = vld [vmem:[%s3 + $0x38] sm:$0xf]
        %v422 = vld [vmem:[%s3 + $0x3c] sm:$0xf]
        %v423 = vld [vmem:[%s4] sm:$0x1]
        %v424 = vpack.c.bf16 %v392, %v391
        %v425 = vpack.c.bf16 %v394, %v393
        %v426 = vpack.c.bf16 %v396, %v395
        %v427 = vpack.c.bf16 %v398, %v397
        %v428 = vpack.c.bf16 %v400, %v399
        %v429 = vpack.c.bf16 %v402, %v401
        %v430 = vpack.c.bf16 %v404, %v403
        %v431 = vpack.c.bf16 %v406, %v405
        %v433 = vperm.slane %v423, 0
        %v451 = vunpack.c.l.b16 %v407
        %v452 = vunpack.c.l.b16 %v408
        %v453 = vunpack.c.l.b16 %v409
        %v454 = vunpack.c.l.b16 %v410
        %v455 = vunpack.c.l.b16 %v411
        %v456 = vunpack.c.l.b16 %v412
        %v457 = vunpack.c.l.b16 %v413
        %v458 = vunpack.c.l.b16 %v414
        %v459 = vunpack.c.l.b16 %v415
        %v460 = vunpack.c.l.b16 %v416
        %v461 = vunpack.c.l.b16 %v417
        %v462 = vunpack.c.l.b16 %v418
        %v463 = vunpack.c.l.b16 %v419
        %v464 = vunpack.c.l.b16 %v420
        %v465 = vunpack.c.l.b16 %v421
        %v466 = vunpack.c.l.b16 %v422
        %v467 = vpack.c.b16 %v452, %v451
        %v468 = vpack.c.b16 %v454, %v453
        %v469 = vpack.c.b16 %v456, %v455
        %v470 = vpack.c.b16 %v458, %v457
        %v471 = vpack.c.b16 %v460, %v459
        %v472 = vpack.c.b16 %v462, %v461
        %v473 = vpack.c.b16 %v464, %v463
        %v474 = vpack.c.b16 %v466, %v465
        %483 = vmatpush.bf16.msra.mxu0 %v474
        %484 = vmatpush.bf16.msra.mxu0 %v473
        %485 = vmatpush.bf16.msra.mxu0 %v472
        %486 = vmatpush.bf16.msra.mxu0 %v471
        %487 = vmatpush.bf16.msra.mxu0 %v470
        %488 = vmatpush.bf16.msra.mxu0 %v469
        %489 = vmatpush.bf16.msra.mxu0 %v468
        %490 = vmatpush.bf16.msra.mxu0 %v467
        %491 = vmatmul.bf16.gmra.mxu0 %v424
        %v492 = vpop.f32.mrf.mxu0
        %v493 = vadd.f32 %v433, %v492
        %v494 = vpop.f32.mrf.mxu0
        %v495 = vadd.f32 %v433, %v494
        %496 = vmatmul.bf16.gmra.mxu0 %v425
        %v497 = vpop.f32.mrf.mxu0
        %v498 = vadd.f32 %v433, %v497
        %v499 = vpop.f32.mrf.mxu0
        %v500 = vadd.f32 %v433, %v499
        %501 = vmatmul.bf16.gmra.mxu0 %v426
        %v502 = vpop.f32.mrf.mxu0
        %v503 = vadd.f32 %v433, %v502
        %v504 = vpop.f32.mrf.mxu0
        %v505 = vadd.f32 %v433, %v504
        %506 = vmatmul.bf16.gmra.mxu0 %v427
        %v507 = vpop.f32.mrf.mxu0
        %v508 = vadd.f32 %v433, %v507
        %v509 = vpop.f32.mrf.mxu0
        %v510 = vadd.f32 %v433, %v509
        %511 = vmatmul.bf16.gmra.mxu0 %v428
        %v512 = vpop.f32.mrf.mxu0
        %v513 = vadd.f32 %v433, %v512
        %v514 = vpop.f32.mrf.mxu0
        %v515 = vadd.f32 %v433, %v514
        %516 = vmatmul.bf16.gmra.mxu0 %v429
        %v517 = vpop.f32.mrf.mxu0
        %v518 = vadd.f32 %v433, %v517
        %v519 = vpop.f32.mrf.mxu0
        %v520 = vadd.f32 %v433, %v519
        %521 = vmatmul.bf16.gmra.mxu0 %v430
        %v522 = vpop.f32.mrf.mxu0
        %v523 = vadd.f32 %v433, %v522
        %v524 = vpop.f32.mrf.mxu0
        %v525 = vadd.f32 %v433, %v524
        %526 = vmatmul.bf16.gmra.mxu0 %v431
        %v527 = vpop.f32.mrf.mxu0
        %v528 = vadd.f32 %v433, %v527
        %v529 = vpop.f32.mrf.mxu0
        %v530 = vadd.f32 %v433, %v529
        %531 = vdwg.mxu0
        %v532 = vmax.f32 %v493, 0.0
        %v533 = vmax.f32 %v495, 0.0
        %v534 = vmax.f32 %v498, 0.0
        %v535 = vmax.f32 %v500, 0.0
        %v536 = vmax.f32 %v503, 0.0
        %v537 = vmax.f32 %v505, 0.0
        %v538 = vmax.f32 %v508, 0.0
        %v539 = vmax.f32 %v510, 0.0
        %v540 = vmax.f32 %v513, 0.0
        %v541 = vmax.f32 %v515, 0.0
        %v542 = vmax.f32 %v518, 0.0
        %v543 = vmax.f32 %v520, 0.0
        %v544 = vmax.f32 %v523, 0.0
        %v545 = vmax.f32 %v525, 0.0
        %v546 = vmax.f32 %v528, 0.0
        %v547 = vmax.f32 %v530, 0.0
        %v548 = vld [vmem:[%s5] sm:$0xf]
        %v549 = vld [vmem:[%s5 + $0x4] sm:$0xf]
        %v550 = vld [vmem:[%s5 + $0x8] sm:$0xf]
        %v551 = vld [vmem:[%s5 + $0xc] sm:$0xf]
        %v552 = vld [vmem:[%s5 + $0x10] sm:$0xf]
        %v553 = vld [vmem:[%s5 + $0x14] sm:$0xf]
        %v554 = vld [vmem:[%s5 + $0x18] sm:$0xf]
        %v555 = vld [vmem:[%s5 + $0x1c] sm:$0xf]
        %v556 = vld [vmem:[%s5 + $0x20] sm:$0xf]
        %v557 = vld [vmem:[%s5 + $0x24] sm:$0xf]
        %v558 = vld [vmem:[%s5 + $0x28] sm:$0xf]
        %v559 = vld [vmem:[%s5 + $0x2c] sm:$0xf]
        %v560 = vld [vmem:[%s5 + $0x30] sm:$0xf]
        %v561 = vld [vmem:[%s5 + $0x34] sm:$0xf]
        %v562 = vld [vmem:[%s5 + $0x38] sm:$0xf]
        %v563 = vld [vmem:[%s5 + $0x3c] sm:$0xf]
        %v564 = vld [vmem:[%s6] sm:$0x1]
        %v565 = vpack.c.bf16 %v533, %v532
        %v566 = vpack.c.bf16 %v535, %v534
        %v567 = vpack.c.bf16 %v537, %v536
        %v568 = vpack.c.bf16 %v539, %v538
        %v569 = vpack.c.bf16 %v541, %v540
        %v570 = vpack.c.bf16 %v543, %v542
        %v571 = vpack.c.bf16 %v545, %v544
        %v572 = vpack.c.bf16 %v547, %v546
        %v574 = vperm.slane %v564, 0
        %v592 = vunpack.c.l.b16 %v548
        %v593 = vunpack.c.l.b16 %v549
        %v594 = vunpack.c.l.b16 %v550
        %v595 = vunpack.c.l.b16 %v551
        %v596 = vunpack.c.l.b16 %v552
        %v597 = vunpack.c.l.b16 %v553
        %v598 = vunpack.c.l.b16 %v554
        %v599 = vunpack.c.l.b16 %v555
        %v600 = vunpack.c.l.b16 %v556
        %v601 = vunpack.c.l.b16 %v557
        %v602 = vunpack.c.l.b16 %v558
        %v603 = vunpack.c.l.b16 %v559
        %v604 = vunpack.c.l.b16 %v560
        %v605 = vunpack.c.l.b16 %v561
        %v606 = vunpack.c.l.b16 %v562
        %v607 = vunpack.c.l.b16 %v563
        %v608 = vpack.c.b16 %v593, %v592
        %v609 = vpack.c.b16 %v595, %v594
        %v610 = vpack.c.b16 %v597, %v596
        %v611 = vpack.c.b16 %v599, %v598
        %v612 = vpack.c.b16 %v601, %v600
        %v613 = vpack.c.b16 %v603, %v602
        %v614 = vpack.c.b16 %v605, %v604
        %v615 = vpack.c.b16 %v607, %v606
        %624 = vmatpush.bf16.msra.mxu0 %v615
        %625 = vmatpush.bf16.msra.mxu0 %v614
        %626 = vmatpush.bf16.msra.mxu0 %v613
        %627 = vmatpush.bf16.msra.mxu0 %v612
        %628 = vmatpush.bf16.msra.mxu0 %v611
        %629 = vmatpush.bf16.msra.mxu0 %v610
        %630 = vmatpush.bf16.msra.mxu0 %v609
        %631 = vmatpush.bf16.msra.mxu0 %v608
        %632 = vmatmul.bf16.gmra.mxu0 %v565
        %v633 = vpop.f32.mrf.mxu0
        %v634 = vadd.f32 %v574, %v633
        %v635 = vpop.f32.mrf.mxu0
        %v636 = vadd.f32 %v574, %v635
        %637 = vmatmul.bf16.gmra.mxu0 %v566
        %v638 = vpop.f32.mrf.mxu0
        %v639 = vadd.f32 %v574, %v638
        %v640 = vpop.f32.mrf.mxu0
        %v641 = vadd.f32 %v574, %v640
        %642 = vmatmul.bf16.gmra.mxu0 %v567
        %v643 = vpop.f32.mrf.mxu0
        %v644 = vadd.f32 %v574, %v643
        %v645 = vpop.f32.mrf.mxu0
        %v646 = vadd.f32 %v574, %v645
        %647 = vmatmul.bf16.gmra.mxu0 %v568
        %v648 = vpop.f32.mrf.mxu0
        %v649 = vadd.f32 %v574, %v648
        %v650 = vpop.f32.mrf.mxu0
        %v651 = vadd.f32 %v574, %v650
        %652 = vmatmul.bf16.gmra.mxu0 %v569
        %v653 = vpop.f32.mrf.mxu0
        %v654 = vadd.f32 %v574, %v653
        %v655 = vpop.f32.mrf.mxu0
        %v656 = vadd.f32 %v574, %v655
        %657 = vmatmul.bf16.gmra.mxu0 %v570
        %v658 = vpop.f32.mrf.mxu0
        %v659 = vadd.f32 %v574, %v658
        %v660 = vpop.f32.mrf.mxu0
        %v661 = vadd.f32 %v574, %v660
        %662 = vmatmul.bf16.gmra.mxu0 %v571
        %v663 = vpop.f32.mrf.mxu0
        %v664 = vadd.f32 %v574, %v663
        %v665 = vpop.f32.mrf.mxu0
        %v666 = vadd.f32 %v574, %v665
        %667 = vmatmul.bf16.gmra.mxu0 %v572
        %v668 = vpop.f32.mrf.mxu0
        %v669 = vadd.f32 %v574, %v668
        %v670 = vpop.f32.mrf.mxu0
        %v671 = vadd.f32 %v574, %v670
        %672 = vdwg.mxu0
        %673 = vst [vmem:[%s272] sm:$0xff] %v634
        %674 = vst [vmem:[%s272 + $0x8] sm:$0xff] %v636
        %675 = vst [vmem:[%s272 + $0x10] sm:$0xff] %v639
        %676 = vst [vmem:[%s272 + $0x18] sm:$0xff] %v641
        %677 = vst [vmem:[%s272 + $0x20] sm:$0xff] %v644
        %678 = vst [vmem:[%s272 + $0x28] sm:$0xff] %v646
        %679 = vst [vmem:[%s272 + $0x30] sm:$0xff] %v649
        %680 = vst [vmem:[%s272 + $0x38] sm:$0xff] %v651
        %681 = vst [vmem:[%s272 + $0x40] sm:$0xff] %v654
        %682 = vst [vmem:[%s272 + $0x48] sm:$0xff] %v656
        %683 = vst [vmem:[%s272 + $0x50] sm:$0xff] %v659
        %684 = vst [vmem:[%s272 + $0x58] sm:$0xff] %v661
        %685 = vst [vmem:[%s272 + $0x60] sm:$0xff] %v664
        %686 = vst [vmem:[%s272 + $0x68] sm:$0xff] %v666
        %687 = vst [vmem:[%s272 + $0x70] sm:$0xff] %v669
        %688 = vst [vmem:[%s272 + $0x78] sm:$0xff] %v671
        %s689 = sand.u32 %s181, 1
        %s690 = scalar_lea.sflag [#allocation3], %s689
        %s691 = sand.u32 %s181, 1
        %s692 = smul.addr %s691, 128
        %s693 = scalar_lea.vmem [#allocation2], %s692
        // Predicated region
        $region49: #{tpu_custom_call.1} parent=47 // pred_check
          %p694 = pneg %p191
        $region50: #{tpu_custom_call.1} parent=47 // pred_check_branch
          %696 = sbr.rel (%p694) target = $region52
        $region51: #{tpu_custom_call.1} parent=47 // pred_region
          %s697 = smul.u32 16, %s21
          %699 = vsyncadd %s690, 0
          %s700 = smul.addr %s697, 8
          %s701 = scalar_lea.hbm %s7, %s700
          %s702 = sshll.u32 %s693, 4
          %s703 = int_to_ptr.vmem [resolvable:$true] %s702
          %s704 = sshll.u32 %s701, 4
          %s705 = int_to_ptr.hbm [resolvable:$true] %s704
          %710 = dma.vmem_to_hbm [thread:$0]  %s703, 2048, %s705, %s690, 128, 128, 8
        $region52: #{tpu_custom_call.1} parent=47 // pred_fallthru
          _
      $region48: #{tpu_custom_call.1} parent=5 // pred_fallthru
        _
      %p711 = scmp.le.s32.totalorder 2, %s16
      // Predicated region
      $region53: #{tpu_custom_call.1} parent=5 // pred_check
        %p712 = pneg %p711
      $region54: #{tpu_custom_call.1} parent=5 // pred_check_branch
        %714 = sbr.rel (%p712) target = $region56
      $region55: #{tpu_custom_call.1} parent=5 // pred_region
        %s715 = ssub.s32 %s16, 2
        // Predicated region
        $region57: #{tpu_custom_call.1} parent=55 // pred_check
          %p716 = pneg %p197
        $region58: #{tpu_custom_call.1} parent=55 // pred_check_branch
          %718 = sbr.rel (%p716) target = $region60
        $region59: #{tpu_custom_call.1} parent=55 // pred_region
          %s719 = sand.u32 %s182, 1
          %s720 = scalar_lea.sflag [#allocation3], %s719
          %s721 = sand.u32 %s182, 1
          %s722 = smul.addr %s721, 128
          %s723 = scalar_lea.vmem [#allocation2], %s722
          %725 = dma.done %s720, 2048
        $region60: #{tpu_custom_call.1} parent=55 // pred_fallthru
          _
      $region56: #{tpu_custom_call.1} parent=5 // pred_fallthru
        _
    $region6: #{tpu_custom_call.1} parent=1 // loop_footer
      %s20 = sadd.s32 1, %s16
    $region7: #{tpu_custom_call.1} parent=1 // loop_footer_branch
      %15 = sbr.rel target = $region3
    $region8: #{tpu_custom_call.1} parent=1 // loop_exit
      _
    %726 = vsyncpa [#allocation3], 1
    %s727 = scalar_lea.sflag [#allocation3], 1
    %728 = vsyncpa %s727, 1

</llo_original>
